<compile_context>
chip_gen: v5e
topology: v5e:2x2
jax: 0.10.0
libtpu: 0.0.40
codegen_flags: <defaults>
</compile_context>

<pallas_src>
import jax
import jax.numpy as jnp
from jax.experimental import pallas as pl
from jax.experimental.pallas import tpu as pltpu


def _maskblock_kernel(b_ref, x_ref, m_ref, o_ref):
    # b_ref:  SMEM (1,) float32   -- binary_tensor (0.0 or 1.0)
    # x_ref:  VMEM (NB, C, THW)   -- a batch/lane tile of x
    # m_ref:  VMEM (NB, 1, THW)   -- matching tile of mask_map
    # o_ref:  VMEM (NB, C, THW)
    x = x_ref[...].astype(jnp.float32)                  # (NB, C, THW)
    x0 = jnp.mean(x, axis=1, keepdims=True)             # (NB, 1, THW) mean over C
    importance_map = jax.nn.sigmoid(x0)                 # (NB, 1, THW)
    b = b_ref[0]                                        # scalar 0.0 or 1.0
    final_mask = (1.0 - b) * importance_map + b * m_ref[...].astype(jnp.float32)
    o_ref[...] = (x * final_mask).astype(o_ref.dtype)   # broadcast over C


# ~2 MiB x-block: fits v5e's 16 MiB default scoped VMEM with double buffering
# (x + out + mask, 2 buffers each ~= 9 MiB) and leaves headroom on v6e/v7x.
_TARGET_BLOCK_BYTES = 2 * 1024 * 1024


def _choose_tiling(N, C, HW, itemsize):
    """Pick (NB, THW): batch rows per block and lane-tile width (mult of 128)."""
    row_bytes = C * HW * itemsize                # one batch element, full lanes
    if row_bytes >= _TARGET_BLOCK_BYTES:
        # One batch element is already big: keep NB=1, tile the lane dim.
        NB = 1
        max_lanes = max(128, (_TARGET_BLOCK_BYTES // (C * itemsize)) // 128 * 128)
        THW = 128
        cand = (min(max_lanes, HW) // 128) * 128
        while cand >= 128:
            if HW % cand == 0:
                THW = cand
                break
            cand -= 128
    else:
        THW = HW
        NB = max(1, min(N, _TARGET_BLOCK_BYTES // row_bytes))
    return NB, THW


def mask_block_forward(x, mask_map, adl_drop_rate, key):
    """x: (N, C, H, W) f32; mask_map: (N, 1, H, W) f32."""
    N, C, H, W = x.shape
    HW = H * W
    x_flat = x.reshape(N, C, HW)
    m_flat = mask_map.reshape(N, 1, HW)

    # Pad lane dim to a multiple of 128 -> lane-dense (unmasked) stores.
    # Padded columns compute independently and are sliced away afterwards.
    HW_pad = ((HW + 127) // 128) * 128
    if HW_pad != HW:
        pad = HW_pad - HW
        x_flat = jnp.pad(x_flat, ((0, 0), (0, 0), (0, pad)))
        m_flat = jnp.pad(m_flat, ((0, 0), (0, 0), (0, pad)))

    NB, THW = _choose_tiling(N, C, HW_pad, x.dtype.itemsize)
    # v7x megacore: keep >= 2 parallel grid steps when the whole problem would
    # otherwise collapse into a single block.
    if N >= 2 and NB >= N and THW == HW_pad:
        NB = pl.cdiv(N, 2)

    grid = (pl.cdiv(N, NB), HW_pad // THW)

    # random_tensor = rand([]) + drop_rate; binary_tensor = floor(...)
    rand = jax.random.uniform(key, (), dtype=jnp.float32)
    binary_tensor = jnp.floor(rand + jnp.float32(adl_drop_rate)).reshape(1)

    out_flat = pl.pallas_call(
        _maskblock_kernel,
        out_shape=jax.ShapeDtypeStruct((N, C, HW_pad), x.dtype),
        grid=grid,
        in_specs=[
            pl.BlockSpec(memory_space=pltpu.MemorySpace.SMEM),        # binary_tensor
            pl.BlockSpec((NB, C, THW), lambda n, h: (n, 0, h)),       # x
            pl.BlockSpec((NB, 1, THW), lambda n, h: (n, 0, h)),       # mask_map
        ],
        out_specs=pl.BlockSpec((NB, C, THW), lambda n, h: (n, 0, h)),
        compiler_params=pltpu.CompilerParams(
            dimension_semantics=("parallel", "parallel")),
    )(binary_tensor, x_flat, m_flat)

    if HW_pad != HW:
        out_flat = out_flat[:, :, :HW]
    return out_flat.reshape(N, C, H, W)


def _reference(x, mask_map, binary_tensor):
    x0 = jnp.mean(x, axis=1, keepdims=True)
    importance_map = jax.nn.sigmoid(x0)
    final_mask = (1.0 - binary_tensor) * importance_map + binary_tensor * mask_map
    return x * final_mask


if __name__ == "__main__":
    key = jax.random.PRNGKey(0)
    k_x, k_m, k_r = jax.random.split(key, 3)

    N, C, H, W = 2, 4, 16, 16
    adl_drop_rate = 0.75

    x = jax.random.normal(k_x, (N, C, H, W), dtype=jnp.float32)
    mask_map = jax.random.uniform(k_m, (N, 1, H, W), dtype=jnp.float32)

    out = mask_block_forward(x, mask_map, adl_drop_rate, k_r)
    out = jax.block_until_ready(out)

    # correctness check against pure-JAX reference (same RNG draw)
    rand = jax.random.uniform(k_r, (), dtype=jnp.float32)
    binary_tensor = jnp.floor(rand + jnp.float32(adl_drop_rate))
    ref = _reference(x, mask_map, binary_tensor)
    assert out.shape == (N, C, H, W)
    assert jnp.allclose(out, ref, atol=1e-5, rtol=1e-5)

    print("KERNEL_OK")
</pallas_src>

<mosaic_0001>
module attributes {stable_mosaic.version = 11 : i64} {
  func.func @_maskblock_kernel(%arg0: i32, %arg1: i32, %arg2: memref<1xf32, #tpu.memory_space<smem>>, %arg3: memref<1x4x256xf32, #tpu.memory_space<vmem>>, %arg4: memref<1x1x256xf32, #tpu.memory_space<vmem>>, %arg5: memref<1x4x256xf32, #tpu.memory_space<vmem>>) attributes {dimension_semantics = [#tpu.dimension_semantics<parallel>, #tpu.dimension_semantics<parallel>], iteration_bounds = array<i64: 2, 1>, scalar_prefetch = 0 : i64, scratch_operands = 0 : i64, tpu.core_type = #tpu.core_type<tc>, window_params = [{transform_indices = @transform_0, window_bounds = array<i64: 1>}, {transform_indices = @transform_1, window_bounds = array<i64: 1, 4, 256>}, {transform_indices = @transform_2, window_bounds = array<i64: 1, 1, 256>}, {transform_indices = @transform_3, window_bounds = array<i64: 1, 4, 256>}]} {
    %c0 = arith.constant 0 : index
    %c0_0 = arith.constant 0 : index
    %c0_1 = arith.constant 0 : index
    %0 = vector.load %arg3[%c0, %c0_0, %c0_1] : memref<1x4x256xf32, #tpu.memory_space<vmem>>, vector<1x4x256xf32>
    %cst = arith.constant dense<0.000000e+00> : vector<1x256xf32>
    %1 = vector.multi_reduction <add>, %0, %cst [1] : vector<1x4x256xf32> to vector<1x256xf32>
    %2 = vector.shape_cast %1 : vector<1x256xf32> to vector<1x1x256xf32>
    %cst_2 = arith.constant 4.000000e+00 : f32
    %3 = vector.broadcast %cst_2 : f32 to vector<1x1x256xf32>
    %4 = arith.divf %2, %3 : vector<1x1x256xf32>
    %5 = arith.negf %4 : vector<1x1x256xf32>
    %6 = math.exp %5 : vector<1x1x256xf32>
    %cst_3 = arith.constant 1.000000e+00 : f32
    %7 = vector.broadcast %cst_3 : f32 to vector<1x1x256xf32>
    %8 = arith.addf %7, %6 : vector<1x1x256xf32>
    %9 = arith.divf %7, %8 : vector<1x1x256xf32>
    %c0_4 = arith.constant 0 : index
    %10 = memref.load %arg2[%c0_4] : memref<1xf32, #tpu.memory_space<smem>>
    %cst_5 = arith.constant 1.000000e+00 : f32
    %11 = arith.subf %cst_5, %10 : f32
    %12 = vector.broadcast %11 : f32 to vector<1x1x256xf32>
    %13 = arith.mulf %12, %9 : vector<1x1x256xf32>
    %c0_6 = arith.constant 0 : index
    %c0_7 = arith.constant 0 : index
    %c0_8 = arith.constant 0 : index
    %14 = vector.load %arg4[%c0_6, %c0_7, %c0_8] : memref<1x1x256xf32, #tpu.memory_space<vmem>>, vector<1x1x256xf32>
    %15 = vector.broadcast %10 : f32 to vector<1x1x256xf32>
    %16 = arith.mulf %15, %14 : vector<1x1x256xf32>
    %17 = arith.addf %13, %16 : vector<1x1x256xf32>
    %18 = vector.broadcast %17 : vector<1x1x256xf32> to vector<1x4x256xf32>
    %19 = arith.mulf %0, %18 : vector<1x4x256xf32>
    %c0_9 = arith.constant 0 : index
    %c0_10 = arith.constant 0 : index
    %c0_11 = arith.constant 0 : index
    %20 = vector.load %arg5[%c0_9, %c0_10, %c0_11] : memref<1x4x256xf32, #tpu.memory_space<vmem>>, vector<1x4x256xf32>
    tpu.vector_store %arg5[%c0_9, %c0_10, %c0_11], %19 {strides = array<i32>} : memref<1x4x256xf32, #tpu.memory_space<vmem>>, vector<1x4x256xf32>,
    return
  }
  func.func @transform_0(%arg0: i32, %arg1: i32) -> i32 {
    %c0_i32 = arith.constant 0 : i32
    %c0_i32_0 = arith.constant 0 : i32
    return %c0_i32 : i32
  }
  func.func @transform_1(%arg0: i32, %arg1: i32) -> (i32, i32, i32) {
    %c0_i32 = arith.constant 0 : i32
    %c0_i32_0 = arith.constant 0 : i32
    return %arg0, %c0_i32, %arg1 : i32, i32, i32
  }
  func.func @transform_2(%arg0: i32, %arg1: i32) -> (i32, i32, i32) {
    %c0_i32 = arith.constant 0 : i32
    %c0_i32_0 = arith.constant 0 : i32
    return %arg0, %c0_i32, %arg1 : i32, i32, i32
  }
  func.func @transform_3(%arg0: i32, %arg1: i32) -> (i32, i32, i32) {
    %c0_i32 = arith.constant 0 : i32
    %c0_i32_0 = arith.constant 0 : i32
    return %arg0, %c0_i32, %arg1 : i32, i32, i32
  }
}

</mosaic_0001>

<llo_original>
// kernel: tpu_custom_call.1
$region0: #{tpu_custom_call.1}
  #allocation0 [shape = 'u32[]', space=smem, size = 0x4, offset = 0x4, fixed_abs, tag = 'smem constant byte address 0x4 - core index']
  #allocation1 [shape = 'u32[72,128]{1,0:T(1,128)}', space=vmem, size = 0x9000, scoped, tag = 'internal scratch']
  #allocation2 [shape = 'f32[1]{0:T(128)S(6)}', space=smem, size = 0x200, scoped, tag = 'scoped memory for tpu_custom_call.1']
  %s0 = inlined_call_operand.<no memory space> [shape: f32[1], index: 0, kind: input, shape index: {}]
  %s1 = inlined_call_operand.hbm [shape: f32[2,4,256], index: 1, kind: input, shape index: {}]
  %s2 = inlined_call_operand.hbm [shape: f32[2,1,256], index: 2, kind: input, shape index: {}]
  %s3 = inlined_call_operand.hbm [shape: f32[2,4,256], index: 3, kind: output, shape index: {}]
  %s4 = sld [smem:[#allocation0]]
  $region53: #{tpu_custom_call.1} parent=0
    _
  %s6 = ssub.s32 1, %s4
  %s7 = scalar_select 0, %s6, %s4
  %8 = sst [smem:[#allocation2]] %s0
  $region1: #{tpu_custom_call.1} parent=0
    #allocation3 [shape = 'u8[8192]{0}', space=vmem, size = 0x2000, scoped, tag = 'input window, operand 1']
    #allocation4 [shape = 's32[2]{0}', space=sflag, size = 0x8, scoped, tag = 'scoped memory for tpu_custom_call.1']
    #allocation5 [shape = 's32[2]{0}', space=sflag, size = 0x8, scoped, tag = 'scoped memory for tpu_custom_call.1']
    #allocation6 [shape = 'u8[2048]{0}', space=vmem, size = 0x800, scoped, tag = 'input window, operand 2']
    #allocation7 [shape = 's32[2]{0}', space=sflag, size = 0x8, scoped, tag = 'scoped memory for tpu_custom_call.1']
    #allocation8 [shape = 'u8[8192]{0}', space=vmem, size = 0x2000, scoped, tag = 'output window, operand 0']
    %9 = vsyncpa [#allocation4], 0
    %s10 = scalar_lea.sflag [#allocation4], 1
    %11 = vsyncpa %s10, 0
    %12 = vsyncpa [#allocation7], 0
    %s13 = scalar_lea.sflag [#allocation7], 1
    %14 = vsyncpa %s13, 0
    %15 = vsyncpa [#allocation5], 0
    %s16 = scalar_lea.sflag [#allocation5], 1
    %17 = vsyncpa %s16, 0
    loop: start=0, step=1, limit=4
    $region2: #{tpu_custom_call.1} parent=1 // loop_pre_header
      _
    $region3: #{tpu_custom_call.1} parent=1 // loop_header
      %s19 = sphi 0, %s23
      %p20 = scmp.ge.s32.totalorder %s19, 4
      %s26 = sphi 0, %s38
      %s27 = sphi 0, %s34
      %s28 = sphi 0, %s26
      %s29 = sphi 0, %s27
      %s30 = sphi 0, %s28
      %s31 = sphi 0, %s29
      %s39 = sphi 0, %s39
      %s41 = sphi 0, %s39
      %s42 = sphi 0, %s41
      %s56 = sphi 0, %s42
      %s64 = sphi 0, %s66
      %s67 = sphi 0, %s64
      %s68 = sphi 0, %s67
      %s84 = sphi 0, %s68
      %s92 = sphi 0, %s94
      %s95 = sphi 0, %s92
      %s96 = sphi 0, %s95
      %s112 = sphi 0, %s96
      %s120 = sphi 0, %s122
      %s123 = sphi 0, %s120
      %s124 = sphi 0, %s123
      %s140 = sphi 0, %s124
    $region4: #{tpu_custom_call.1} parent=1 // loop_header_branch
      %22 = sbr.rel (%p20) target = $region8
    $region5: #{tpu_custom_call.1} parent=1 // loop_body
      %s24 = ssub.s32 %s19, 1
      %s25 = ssub.s32 %s19, 2
      %s32 = sadd.s32 1, %s27
      %p33 = scmp.ge.s32.totalorder %s32, 1
      %s34 = scalar_select %p33, 0, %s32
      %s35 = sadd.s32 1, %s26
      %s36 = scalar_select %p33, %s35, %s26
      %p37 = scmp.ge.s32.totalorder %s36, 2
      %s38 = scalar_select %p37, 0, %s36
      %s40 = sadd.s32 %s39, 1
      %p43 = scmp.eq.s32.totalorder %s19, 1
      %p44 = scmp.ne.s32.totalorder %s39, %s41
      %p45 = scmp.eq.s32.totalorder %s19, 0
      %p46 = por %p44, %p45
      %p47 = scmp.ne.s32.totalorder %s39, %s41
      %p48 = scmp.eq.s32.totalorder %s24, 1
      %p49 = por %p47, %p48
      %p50 = scmp.ne.s32.totalorder %s41, %s42
      %p51 = scmp.eq.s32.totalorder %s24, 0
      %p52 = por %p50, %p51
      %p53 = scmp.ne.s32.totalorder %s41, %s42
      %p54 = scmp.eq.s32.totalorder %s25, 1
      %p55 = por %p53, %p54
      %p57 = scmp.ne.s32.totalorder %s42, %s56
      %p58 = scmp.eq.s32.totalorder %s25, 0
      %p59 = por %p57, %p58
      %s60 = ssub.s32 %s26, %s38
      %s61 = ssub.s32 %s27, %s34
      %s62 = sor.u32 %s60, %s61
      %p63 = scmp.eq.s32.totalorder %s62, 0
      %s65 = sadd.s32 %s64, 1
      %s66 = scalar_select %p63, %s64, %s65
      %p69 = pneg %p63
      %p70 = scmp.eq.s32.totalorder %s19, 1
      %p71 = por %p69, %p70
      %p72 = scmp.ne.s32.totalorder %s64, %s67
      %p73 = scmp.eq.s32.totalorder %s19, 0
      %p74 = por %p72, %p73
      %p75 = scmp.ne.s32.totalorder %s64, %s67
      %p76 = scmp.eq.s32.totalorder %s24, 1
      %p77 = por %p75, %p76
      %p78 = scmp.ne.s32.totalorder %s67, %s68
      %p79 = scmp.eq.s32.totalorder %s24, 0
      %p80 = por %p78, %p79
      %p81 = scmp.ne.s32.totalorder %s67, %s68
      %p82 = scmp.eq.s32.totalorder %s25, 1
      %p83 = por %p81, %p82
      %p85 = scmp.ne.s32.totalorder %s68, %s84
      %p86 = scmp.eq.s32.totalorder %s25, 0
      %p87 = por %p85, %p86
      %s88 = ssub.s32 %s26, %s38
      %s89 = ssub.s32 %s27, %s34
      %s90 = sor.u32 %s88, %s89
      %p91 = scmp.eq.s32.totalorder %s90, 0
      %s93 = sadd.s32 %s92, 1
      %s94 = scalar_select %p91, %s92, %s93
      %p97 = pneg %p91
      %p98 = scmp.eq.s32.totalorder %s19, 1
      %p99 = por %p97, %p98
      %p100 = scmp.ne.s32.totalorder %s92, %s95
      %p101 = scmp.eq.s32.totalorder %s19, 0
      %p102 = por %p100, %p101
      %p103 = scmp.ne.s32.totalorder %s92, %s95
      %p104 = scmp.eq.s32.totalorder %s24, 1
      %p105 = por %p103, %p104
      %p106 = scmp.ne.s32.totalorder %s95, %s96
      %p107 = scmp.eq.s32.totalorder %s24, 0
      %p108 = por %p106, %p107
      %p109 = scmp.ne.s32.totalorder %s95, %s96
      %p110 = scmp.eq.s32.totalorder %s25, 1
      %p111 = por %p109, %p110
      %p113 = scmp.ne.s32.totalorder %s96, %s112
      %p114 = scmp.eq.s32.totalorder %s25, 0
      %p115 = por %p113, %p114
      %s116 = ssub.s32 %s26, %s38
      %s117 = ssub.s32 %s27, %s34
      %s118 = sor.u32 %s116, %s117
      %p119 = scmp.eq.s32.totalorder %s118, 0
      %s121 = sadd.s32 %s120, 1
      %s122 = scalar_select %p119, %s120, %s121
      %p125 = pneg %p119
      %p126 = scmp.eq.s32.totalorder %s19, 1
      %p127 = por %p125, %p126
      %p128 = scmp.ne.s32.totalorder %s120, %s123
      %p129 = scmp.eq.s32.totalorder %s19, 0
      %p130 = por %p128, %p129
      %p131 = scmp.ne.s32.totalorder %s120, %s123
      %p132 = scmp.eq.s32.totalorder %s24, 1
      %p133 = por %p131, %p132
      %p134 = scmp.ne.s32.totalorder %s123, %s124
      %p135 = scmp.eq.s32.totalorder %s24, 0
      %p136 = por %p134, %p135
      %p137 = scmp.ne.s32.totalorder %s123, %s124
      %p138 = scmp.eq.s32.totalorder %s25, 1
      %p139 = por %p137, %p138
      %p141 = scmp.ne.s32.totalorder %s124, %s140
      %p142 = scmp.eq.s32.totalorder %s25, 0
      %p143 = por %p141, %p142
      %p144 = scmp.le.s32.totalorder 1, %s19
      %p145 = scmp.lt.s32.totalorder %s19, 3
      %p146 = pnand %p144, %p145
      %p147 = pneg %p146
      // Predicated region
      $region9: #{tpu_custom_call.1} parent=5 // pred_check
        _
      $region10: #{tpu_custom_call.1} parent=5 // pred_check_branch
        %149 = sbr.rel (%p146) target = $region12
      $region11: #{tpu_custom_call.1} parent=5 // pred_region
        %s150 = ssub.s32 %s19, 1
        // Predicated region
        $region13: #{tpu_custom_call.1} parent=11 // pred_check
          %p151 = pneg %p52
        $region14: #{tpu_custom_call.1} parent=11 // pred_check_branch
          %153 = sbr.rel (%p151) target = $region16
        $region15: #{tpu_custom_call.1} parent=11 // pred_region
          _
        $region16: #{tpu_custom_call.1} parent=11 // pred_fallthru
          _
      $region12: #{tpu_custom_call.1} parent=5 // pred_fallthru
        _
      %p154 = scmp.lt.s32.totalorder %s19, 2
      // Predicated region
      $region17: #{tpu_custom_call.1} parent=5 // pred_check
        %p155 = pneg %p154
      $region18: #{tpu_custom_call.1} parent=5 // pred_check_branch
        %157 = sbr.rel (%p155) target = $region20
      $region19: #{tpu_custom_call.1} parent=5 // pred_region
        // Predicated region
        $region21: #{tpu_custom_call.1} parent=19 // pred_check
          %p158 = pneg %p74
        $region22: #{tpu_custom_call.1} parent=19 // pred_check_branch
          %160 = sbr.rel (%p158) target = $region24
        $region23: #{tpu_custom_call.1} parent=19 // pred_region
          %s161 = sand.u32 %s64, 1
          %s162 = scalar_lea.sflag [#allocation4], %s161
          %s163 = sand.u32 %s64, 1
          %s164 = smul.addr %s163, 8
          %s165 = scalar_lea.vmem [#allocation3], %s164
          %s166 = smul.u32 2, %s27
          %168 = vsyncadd %s162, 0
          %s169 = smul.addr %s26, 2
          %s170 = sadd.s32 %s166, %s169
          %s171 = smul.addr %s170, 4
          %s172 = scalar_lea.hbm %s1, %s171
          %s174 = sshll.u32 %s172, 4
          %s175 = int_to_ptr.hbm [resolvable:$true] %s174
          %s176 = sshll.u32 %s165, 4
          %s177 = int_to_ptr.vmem [resolvable:$true] %s176
          %179 = dma.hbm_to_vmem [thread:$0]  %s175, 128, %s177, %s162
        $region24: #{tpu_custom_call.1} parent=19 // pred_fallthru
          _
        // Predicated region
        $region25: #{tpu_custom_call.1} parent=19 // pred_check
          %p180 = pneg %p102
        $region26: #{tpu_custom_call.1} parent=19 // pred_check_branch
          %182 = sbr.rel (%p180) target = $region28
        $region27: #{tpu_custom_call.1} parent=19 // pred_region
          %s183 = sand.u32 %s92, 1
          %s184 = scalar_lea.sflag [#allocation7], %s183
          %s185 = sand.u32 %s92, 1
          %s186 = smul.addr %s185, 2
          %s187 = scalar_lea.vmem [#allocation6], %s186
          %s188 = smul.u32 2, %s27
          %190 = vsyncadd %s184, 0
          %s191 = smul.addr %s26, 2
          %s192 = sadd.s32 %s188, %s191
          %s193 = scalar_lea.hbm %s2, %s192
          %s195 = sshll.u32 %s193, 4
          %s196 = int_to_ptr.hbm [resolvable:$true] %s195
          %s197 = sshll.u32 %s187, 4
          %s198 = int_to_ptr.vmem [resolvable:$true] %s197
          %200 = dma.hbm_to_vmem [thread:$0]  %s196, 32, %s198, %s184
        $region28: #{tpu_custom_call.1} parent=19 // pred_fallthru
          _
      $region20: #{tpu_custom_call.1} parent=5 // pred_fallthru
        _
      %p201 = scmp.le.s32.totalorder 1, %s19
      %p202 = scmp.lt.s32.totalorder %s19, 3
      %p203 = pnand %p201, %p202
      %p204 = pneg %p203
      // Predicated region
      $region29: #{tpu_custom_call.1} parent=5 // pred_check
        _
      $region30: #{tpu_custom_call.1} parent=5 // pred_check_branch
        %206 = sbr.rel (%p203) target = $region32
      $region31: #{tpu_custom_call.1} parent=5 // pred_region
        %s207 = ssub.s32 %s19, 1
        %s208 = sand.u32 %s67, 1
        %s209 = scalar_lea.sflag [#allocation4], %s208
        %s210 = sand.u32 %s67, 1
        %s211 = smul.addr %s210, 8
        %s212 = scalar_lea.vmem [#allocation3], %s211
        // Predicated region
        $region33: #{tpu_custom_call.1} parent=31 // pred_check
          %p213 = pneg %p80
        $region34: #{tpu_custom_call.1} parent=31 // pred_check_branch
          %215 = sbr.rel (%p213) target = $region36
        $region35: #{tpu_custom_call.1} parent=31 // pred_region
          %217 = dma.done %s209, 128
        $region36: #{tpu_custom_call.1} parent=31 // pred_fallthru
          _
        %s218 = sand.u32 %s95, 1
        %s219 = scalar_lea.sflag [#allocation7], %s218
        %s220 = sand.u32 %s95, 1
        %s221 = smul.addr %s220, 2
        %s222 = scalar_lea.vmem [#allocation6], %s221
        // Predicated region
        $region37: #{tpu_custom_call.1} parent=31 // pred_check
          %p223 = pneg %p108
        $region38: #{tpu_custom_call.1} parent=31 // pred_check_branch
          %225 = sbr.rel (%p223) target = $region40
        $region39: #{tpu_custom_call.1} parent=31 // pred_region
          %227 = dma.done %s219, 32
        $region40: #{tpu_custom_call.1} parent=31 // pred_fallthru
          _
        %p228 = pneg %p52
        %p229 = pneg %p49
        %s230 = sand.u32 %s67, 1
        %s231 = scalar_lea.sflag [#allocation4], %s230
        %s232 = sand.u32 %s67, 1
        %s233 = smul.addr %s232, 8
        %s234 = scalar_lea.vmem [#allocation3], %s233
        %p235 = pneg %p80
        %p236 = pneg %p77
        %s237 = sand.u32 %s95, 1
        %s238 = scalar_lea.sflag [#allocation7], %s237
        %s239 = sand.u32 %s95, 1
        %s240 = smul.addr %s239, 2
        %s241 = scalar_lea.vmem [#allocation6], %s240
        %p242 = pneg %p108
        %p243 = pneg %p105
        %p244 = pneg %p136
        %p245 = pneg %p133
        %s246 = sand.u32 %s123, 1
        %s247 = scalar_lea.sflag [#allocation5], %s246
        %s248 = sand.u32 %s123, 1
        %s249 = smul.addr %s248, 8
        %s250 = scalar_lea.vmem [#allocation8], %s249
        %s251 = smul.u32 2, %s29
        %s252 = smul.u32 2, %s29
        %s253 = smul.u32 2, %s29
        %v254 = vld [vmem:[%s212] sm:$0xff]
        %256 = vst [vmem:[#allocation1] ss:$2 sm:$0xff] %v254
        %v257 = vld.sshfl [vmem:[#allocation1] sm:$0xff pattern:$0x75316420]
        %v258 = vld.sshfl [vmem:[#allocation1 + $0x8] sm:$0xff pattern:$0x75316420]
        %vm261 = vcmask 1043456
        %v262 = vsel %vm261, %v257, 0.0
        %v263 = vrot.slane %v262, 4
        %v264 = vadd.f32 %v262, %v263
        %v265 = vrot.slane %v264, 2
        %v266 = vadd.f32 %v264, %v265
        %v267 = vrot.slane %v266, 1
        %v268 = vadd.f32 %v266, %v267
        %v269 = vsel %vm261, %v258, 0.0
        %v270 = vrot.slane %v269, 4
        %v271 = vadd.f32 %v269, %v270
        %v272 = vrot.slane %v271, 2
        %v273 = vadd.f32 %v271, %v272
        %v274 = vrot.slane %v273, 1
        %v275 = vadd.f32 %v273, %v274
        %v276 = vrcp.pop 4.0
        %v277 = vmul.f32 4.0, %v276
        %v278 = vsub.f32 1.0, %v277
        %v279 = vmul.f32 %v276, %v278
        %v280 = vadd.f32 %v276, %v279
        %vm281 = vweird.f32 %v276
        %v282 = vsel %vm281, %v276, %v280
        %v283 = vmul.f32 %v268, %v282
        %v284 = vmul.f32 %v275, %v282
        %v285 = vxor.u32 %v283, 2147483648
        %v286 = vxor.u32 %v284, 2147483648
        %v287 = vmul.f32 %v285, 1.442695
        %v288 = vpow.pop %v287
        %v289 = vmul.f32 %v286, 1.442695
        %v290 = vpow.pop %v289
        %v291 = vadd.f32 %v288, 1.0
        %v292 = vadd.f32 %v290, 1.0
        %v293 = vrcp.pop %v291
        %v294 = vmul.f32 %v291, %v293
        %v295 = vsub.f32 1.0, %v294
        %v296 = vmul.f32 %v293, %v295
        %v297 = vadd.f32 %v293, %v296
        %vm298 = vweird.f32 %v291
        %vm299 = vweird.f32 %v293
        %vm300 = vmor %vm298, %vm299
        %v301 = vsel %vm300, %v293, %v297
        %v302 = vand.u32 2147483647, %v291
        %vm303 = vcmp.eq.f32.partialorder %v302, 8.507059e+37
        %v304 = vand.u32 %v291, 2147483648
        %v305 = vor.u32 1.1754944e-38, %v304
        %v306 = vsel %vm303, %v305, %v301
        %v307 = vmul.f32 1.0, %v306
        %v308 = vrcp.pop %v292
        %v309 = vmul.f32 %v292, %v308
        %v310 = vsub.f32 1.0, %v309
        %v311 = vmul.f32 %v308, %v310
        %v312 = vadd.f32 %v308, %v311
        %vm313 = vweird.f32 %v292
        %vm314 = vweird.f32 %v308
        %vm315 = vmor %vm313, %vm314
        %v316 = vsel %vm315, %v308, %v312
        %v317 = vand.u32 2147483647, %v292
        %vm318 = vcmp.eq.f32.partialorder %v317, 8.507059e+37
        %v319 = vand.u32 %v292, 2147483648
        %v320 = vor.u32 1.1754944e-38, %v319
        %v321 = vsel %vm318, %v320, %v316
        %v322 = vmul.f32 1.0, %v321
        %s323 = sld [smem:[#allocation2]]
        %s324 = ssub.f32 1.0, %s323
        %v325 = vstv %s324
        %v326 = vmul.f32 %v325, %v307
        %v327 = vmul.f32 %v325, %v322
        %v328 = vld [vmem:[%s222] sm:$0x3]
        %v329 = vstv %s323
        %v330 = vmul.f32 %v329, %v328
        %v332 = vperm.slane %v330, 0
        %v333 = vperm.slane %v330, 1
        %v336 = vadd.f32 %v326, %v332
        %v337 = vadd.f32 %v327, %v333
        %v338 = vperm.slane %v336, 0
        %v339 = vperm.slane %v337, 0
        %v342 = vrot.slane %v339, 4
        %v343 = vsel %vm261, %v338, %v342
        %v345 = vmul.f32 %v254, %v343
        %346 = vst [vmem:[%s250] sm:$0xff] %v345
        %s347 = sand.u32 %s123, 1
        %s348 = scalar_lea.sflag [#allocation5], %s347
        %s349 = sand.u32 %s123, 1
        %s350 = smul.addr %s349, 8
        %s351 = scalar_lea.vmem [#allocation8], %s350
        // Predicated region
        $region41: #{tpu_custom_call.1} parent=31 // pred_check
          %p352 = pneg %p133
        $region42: #{tpu_custom_call.1} parent=31 // pred_check_branch
          %354 = sbr.rel (%p352) target = $region44
        $region43: #{tpu_custom_call.1} parent=31 // pred_region
          %s355 = smul.u32 2, %s29
          %357 = vsyncadd %s348, 0
          %s358 = smul.addr %s28, 2
          %s359 = sadd.s32 %s355, %s358
          %s360 = smul.addr %s359, 4
          %s361 = scalar_lea.hbm %s3, %s360
          %s363 = sshll.u32 %s351, 4
          %s364 = int_to_ptr.vmem [resolvable:$true] %s363
          %s365 = sshll.u32 %s361, 4
          %s366 = int_to_ptr.hbm [resolvable:$true] %s365
          %368 = dma.vmem_to_hbm [thread:$0]  %s364, 128, %s366, %s348
        $region44: #{tpu_custom_call.1} parent=31 // pred_fallthru
          _
      $region32: #{tpu_custom_call.1} parent=5 // pred_fallthru
        _
      %p369 = scmp.le.s32.totalorder 2, %s19
      // Predicated region
      $region45: #{tpu_custom_call.1} parent=5 // pred_check
        %p370 = pneg %p369
      $region46: #{tpu_custom_call.1} parent=5 // pred_check_branch
        %372 = sbr.rel (%p370) target = $region48
      $region47: #{tpu_custom_call.1} parent=5 // pred_region
        %s373 = ssub.s32 %s19, 2
        // Predicated region
        $region49: #{tpu_custom_call.1} parent=47 // pred_check
          %p374 = pneg %p139
        $region50: #{tpu_custom_call.1} parent=47 // pred_check_branch
          %376 = sbr.rel (%p374) target = $region52
        $region51: #{tpu_custom_call.1} parent=47 // pred_region
          %s377 = sand.u32 %s124, 1
          %s378 = scalar_lea.sflag [#allocation5], %s377
          %s379 = sand.u32 %s124, 1
          %s380 = smul.addr %s379, 8
          %s381 = scalar_lea.vmem [#allocation8], %s380
          %383 = dma.done %s378, 128
        $region52: #{tpu_custom_call.1} parent=47 // pred_fallthru
          _
      $region48: #{tpu_custom_call.1} parent=5 // pred_fallthru
        _
    $region6: #{tpu_custom_call.1} parent=1 // loop_footer
      %s23 = sadd.s32 1, %s19
    $region7: #{tpu_custom_call.1} parent=1 // loop_footer_branch
      %18 = sbr.rel target = $region3
    $region8: #{tpu_custom_call.1} parent=1 // loop_exit
      _
    %384 = vsyncpa [#allocation4], 1
    %s385 = scalar_lea.sflag [#allocation4], 1
    %386 = vsyncpa %s385, 1
    %387 = vsyncpa [#allocation7], 1
    %s388 = scalar_lea.sflag [#allocation7], 1
    %389 = vsyncpa %s388, 1
    %390 = vsyncpa [#allocation5], 1
    %s391 = scalar_lea.sflag [#allocation5], 1
    %392 = vsyncpa %s391, 1

</llo_original>
